<compile_context>
chip_gen: v5e
topology: v5e:2x2
jax: 0.10.0
libtpu: 0.0.40
codegen_flags: <defaults>
</compile_context>

<pallas_src>
import functools

import jax
import jax.numpy as jnp
from jax import lax
from jax.experimental import pallas as pl
from jax.experimental.pallas import tpu as pltpu

LANE = 128
_FUSED_VMEM_BUDGET = 40 << 20   # conservative so the fused path also fits v7x


# ----------------------------------------------------------------------------
# Small helpers
# ----------------------------------------------------------------------------
def _round_up(v, m):
    return ((v + m - 1) // m) * m


def _pad_to(a, shape):
    out = jnp.zeros(shape, a.dtype)
    return out.at[tuple(slice(0, s) for s in a.shape)].set(a)


def _feature_pad(params):
    widest = max(max(w.shape[0], w.shape[1]) for w, _ in params)
    return _round_up(widest, LANE)


def _masked_log_softmax(logits_f32, valid_cols):
    """Numerically stable log_softmax over the first `valid_cols` lanes (f32)."""
    if valid_cols == logits_f32.shape[-1]:
        m = jnp.max(logits_f32, axis=-1, keepdims=True)
        s = logits_f32 - m
        return s - jnp.log(jnp.sum(jnp.exp(s), axis=-1, keepdims=True))
    col = lax.broadcasted_iota(jnp.int32, logits_f32.shape, 1)
    valid = col < valid_cols
    xm = jnp.where(valid, logits_f32, jnp.float32(-1e30))
    m = jnp.max(xm, axis=-1, keepdims=True)
    s = xm - m
    lse = jnp.log(jnp.sum(jnp.where(valid, jnp.exp(s), 0.0),
                          axis=-1, keepdims=True))
    return jnp.where(valid, s - lse, 0.0)


# ----------------------------------------------------------------------------
# Fully-fused kernel: grid axis = layer index, activation carried in VMEM
# ----------------------------------------------------------------------------
def fused_gcn_kernel(a_ref, x_hbm, w_ref, b_ref, o_ref, act_ref, *,
                     out_ch, apply_log_softmax):
    """Per grid step l:  h <- act(A @ (h @ W_l) + b_l), h carried in VMEM."""
    l = pl.program_id(0)
    n_layers = pl.num_programs(0)

    # One-time seed of the carried activation from HBM (x only needed at l==0,
    # so it never occupies a resident pipelined VMEM buffer).
    @pl.when(l == 0)
    def _():
        pltpu.sync_copy(x_hbm, act_ref)

    h = act_ref[...]                                       # (N_pad, F_pad) bf16
    xw = jnp.dot(h, w_ref[...], preferred_element_type=jnp.float32)
    agg = jnp.dot(a_ref[...], xw.astype(jnp.bfloat16),
                  preferred_element_type=jnp.float32)
    out = agg + b_ref[...]                                 # + (1, F_pad) f32

    is_last = l == n_layers - 1

    @pl.when(jnp.logical_not(is_last))
    def _():
        # Hidden layers: ReLU. Dropout is identity at inference.
        act_ref[...] = jnp.maximum(out, 0.0).astype(act_ref.dtype)

    @pl.when(is_last)
    def _():
        if apply_log_softmax:
            o_ref[...] = _masked_log_softmax(out, out_ch).astype(o_ref.dtype)
        else:
            o_ref[...] = out.astype(o_ref.dtype)


def _fused_forward(w_stack, b_stack, x_p, a_p, *, out_ch, apply_log_softmax):
    n_pad, f_pad = x_p.shape
    num_layers = w_stack.shape[0]

    kernel = functools.partial(fused_gcn_kernel, out_ch=out_ch,
                               apply_log_softmax=apply_log_softmax)

    # VMEM budget: single-buffered adjacency + carried activation + bf16 output
    # + double-buffered per-layer W/b + f32 epilogue temporaries, with margin.
    resident = a_p.size * 2 + 2 * n_pad * f_pad * 2
    streamed = 2 * (f_pad * f_pad * 2 + f_pad * 4)
    temps = 4 * n_pad * f_pad * 4
    need = resident + streamed + temps
    vmem_limit = int(min(max(2 * need, 32 << 20), 48 << 20))

    flops = num_layers * (2 * n_pad * f_pad * f_pad + 2 * n_pad * n_pad * f_pad)
    cost = pl.CostEstimate(
        flops=flops,
        transcendentals=(n_pad * f_pad if apply_log_softmax else 0),
        bytes_accessed=(a_p.size * 2 + x_p.size * 2 + w_stack.size * 2
                        + b_stack.size * 4 + n_pad * f_pad * 2))

    return pl.pallas_call(
        kernel,
        out_shape=jax.ShapeDtypeStruct((n_pad, f_pad), jnp.bfloat16),
        grid=(num_layers,),
        in_specs=[
            # Adjacency: constant block index -> DMA'd once, single-buffered.
            pl.BlockSpec((n_pad, n_pad), lambda l: (0, 0),
                         pipeline_mode=pl.Buffered(1)),
            # x stays in HBM; copied into act scratch once inside the kernel.
            pl.BlockSpec(memory_space=pl.ANY),
            pl.BlockSpec((None, f_pad, f_pad), lambda l: (l, 0, 0)),   # W_l
            pl.BlockSpec((None, 1, f_pad), lambda l: (l, 0, 0)),       # b_l
        ],
        out_specs=pl.BlockSpec((n_pad, f_pad), lambda l: (0, 0),
                               pipeline_mode=pl.Buffered(1)),
        scratch_shapes=[pltpu.VMEM((n_pad, f_pad), jnp.bfloat16)],  # carried act
        compiler_params=pltpu.CompilerParams(
            # Layer axis carries the activation -> strictly sequential.
            dimension_semantics=("arbitrary",),
            vmem_limit_bytes=vmem_limit),
        cost_estimate=cost,
    )(a_p, x_p, w_stack, b_stack)


# ----------------------------------------------------------------------------
# Row-tiled per-layer fallback (large N / v7x 64 MiB VMEM):
#   layer = two kernels, XW then row-tiled A@XW + bias + activation.
#   Row axis is "parallel" so it shards across both TensorCores on v7x.
# ----------------------------------------------------------------------------
def _xw_kernel(x_ref, w_ref, o_ref):
    o_ref[...] = jnp.dot(x_ref[...], w_ref[...],
                         preferred_element_type=jnp.float32).astype(o_ref.dtype)


def _agg_kernel(a_ref, xw_ref, b_ref, o_ref, acc_ref, *,
                out_ch, is_last, apply_log_softmax):
    k = pl.program_id(1)

    @pl.when(k == 0)
    def _():
        acc_ref[...] = jnp.zeros_like(acc_ref)

    acc_ref[...] += jnp.dot(a_ref[...], xw_ref[...],
                            preferred_element_type=jnp.float32)

    @pl.when(k == pl.num_programs(1) - 1)
    def _():
        out = acc_ref[...] + b_ref[...]
        if not is_last:
            o_ref[...] = jnp.maximum(out, 0.0).astype(o_ref.dtype)
        elif apply_log_softmax:
            o_ref[...] = _masked_log_softmax(out, out_ch).astype(o_ref.dtype)
        else:
            o_ref[...] = out.astype(o_ref.dtype)


def _largest_tile(n, cap):
    for t in (cap, 512, 256, 128):
        if t <= n and n % t == 0:
            return t
    return n


def _row_tiled_forward(w_stack, b_stack, x_p, a_p, *, out_ch, apply_log_softmax):
    n_pad, f_pad = x_p.shape
    num_layers = w_stack.shape[0]
    tm = _largest_tile(n_pad, 256)
    tk = _largest_tile(n_pad, 512)

    h = x_p
    for li in range(num_layers):
        is_last = li == num_layers - 1
        w_l = w_stack[li]
        b_l = b_stack[li]

        xw = pl.pallas_call(
            _xw_kernel,
            out_shape=jax.ShapeDtypeStruct((n_pad, f_pad), jnp.bfloat16),
            grid=(n_pad // tm,),
            in_specs=[pl.BlockSpec((tm, f_pad), lambda i: (i, 0)),
                      pl.BlockSpec((f_pad, f_pad), lambda i: (0, 0),
                                   pipeline_mode=pl.Buffered(1))],
            out_specs=pl.BlockSpec((tm, f_pad), lambda i: (i, 0)),
            compiler_params=pltpu.CompilerParams(
                dimension_semantics=("parallel",)),
        )(h, w_l)

        h = pl.pallas_call(
            functools.partial(_agg_kernel, out_ch=out_ch, is_last=is_last,
                              apply_log_softmax=apply_log_softmax),
            out_shape=jax.ShapeDtypeStruct((n_pad, f_pad), jnp.bfloat16),
            grid=(n_pad // tm, n_pad // tk),
            in_specs=[pl.BlockSpec((tm, tk), lambda i, k: (i, k)),
                      pl.BlockSpec((tk, f_pad), lambda i, k: (k, 0)),
                      pl.BlockSpec((1, f_pad), lambda i, k: (0, 0),
                                   pipeline_mode=pl.Buffered(1))],
            out_specs=pl.BlockSpec((tm, f_pad), lambda i, k: (i, 0)),
            scratch_shapes=[pltpu.VMEM((tm, f_pad), jnp.float32)],
            compiler_params=pltpu.CompilerParams(
                dimension_semantics=("parallel", "arbitrary")),
        )(a_p, xw, b_l)
    return h


# ----------------------------------------------------------------------------
# Wrappers: preparation (pad + bf16 cast, done once) and dispatch
# ----------------------------------------------------------------------------
def prepare_gcn_params(params, f_pad):
    w_stack = jnp.stack([_pad_to(w.astype(jnp.bfloat16), (f_pad, f_pad))
                         for w, _ in params])                 # (L, F, F) bf16
    b_stack = jnp.stack([_pad_to(b.astype(jnp.float32), (f_pad,)).reshape(1, f_pad)
                         for _, b in params])                 # (L, 1, F) f32
    return w_stack, b_stack


def prepare_gcn_inputs(x, adj_t, f_pad):
    n = x.shape[0]
    n_pad = _round_up(n, LANE)
    x_p = _pad_to(x.astype(jnp.bfloat16), (n_pad, f_pad))
    a_p = _pad_to(adj_t.astype(jnp.bfloat16), (n_pad, n_pad))  # 0/1 -> exact
    return x_p, a_p


def gcn_forward_padded(w_stack, b_stack, x_p, a_p, *, out_ch, n_valid,
                       if_auc=False, force_row_tiled=False):
    n_pad, f_pad = x_p.shape
    apply_log_softmax = not if_auc

    # Size guard: fully-fused form needs the adjacency + activation resident.
    resident = a_p.size * 2 + 2 * n_pad * f_pad * 2 + 4 * n_pad * f_pad * 4
    use_fused = (not force_row_tiled) and resident <= _FUSED_VMEM_BUDGET

    if use_fused:
        out_p = _fused_forward(w_stack, b_stack, x_p, a_p, out_ch=out_ch,
                               apply_log_softmax=apply_log_softmax)
    else:
        out_p = _row_tiled_forward(w_stack, b_stack, x_p, a_p, out_ch=out_ch,
                                   apply_log_softmax=apply_log_softmax)

    # Drop padded rows / lanes; return f32 like the PyTorch module.
    return out_p[:n_valid, :out_ch].astype(jnp.float32)


def gcn_forward(params, x, adj_t, *, if_auc=False):
    """Convenience wrapper. Prefer prepare_* once + jitted gcn_forward_padded."""
    f_pad = _feature_pad(params)
    w_stack, b_stack = prepare_gcn_params(params, f_pad)
    x_p, a_p = prepare_gcn_inputs(x, adj_t, f_pad)
    return gcn_forward_padded(w_stack, b_stack, x_p, a_p,
                              out_ch=params[-1][0].shape[1],
                              n_valid=x.shape[0], if_auc=if_auc)


# ----------------------------------------------------------------------------
# Parameter init (GCNConv: glorot weight, zero bias) + pure-JAX reference
# ----------------------------------------------------------------------------
def init_gcn_params(key, in_channels, hidden_channels, out_channels, num_layers):
    dims = [in_channels] + [hidden_channels] * (num_layers - 1) + [out_channels]
    params = []
    for li in range(num_layers):
        f_in, f_out = dims[li], dims[li + 1]
        key, wk = jax.random.split(key)
        limit = jnp.sqrt(6.0 / (f_in + f_out))
        w = jax.random.uniform(
            wk, (f_in, f_out), minval=-limit, maxval=limit, dtype=jnp.float32)
        b = jnp.zeros((f_out,), jnp.float32)
        params.append((w, b))
    return params


def reference_forward(params, x, adj_t, *, if_auc=False):
    """Same math, same bf16-operand / f32-accumulate recipe, plain JAX."""
    a = adj_t.astype(jnp.bfloat16)
    h = x.astype(jnp.bfloat16)
    for li, (w, b) in enumerate(params):
        xw = jnp.dot(h, w.astype(jnp.bfloat16),
                     preferred_element_type=jnp.float32)
        out = jnp.dot(a, xw.astype(jnp.bfloat16),
                      preferred_element_type=jnp.float32) + b
        if li < len(params) - 1:
            h = jnp.maximum(out, 0.0).astype(jnp.bfloat16)
        else:
            h = out
    if if_auc:
        return h
    return jax.nn.log_softmax(h, axis=-1)


# ----------------------------------------------------------------------------
if __name__ == "__main__":
    N = 64            # number of nodes (padded to 128 internally)
    IN_CH = 16
    HIDDEN = 32
    OUT_CH = 8
    NUM_LAYERS = 3
    IF_AUC = False

    key = jax.random.PRNGKey(0)
    key, kx, ka, kp = jax.random.split(key, 4)

    # Node features (N, F_in)
    x = jax.random.normal(kx, (N, IN_CH), dtype=jnp.float32)

    # Dense (transposed) adjacency with self-loops, ~10% edge density.
    edge_prob = jax.random.uniform(ka, (N, N))
    adj_t = (edge_prob < 0.1).astype(jnp.float32)
    adj_t = jnp.minimum(adj_t + jnp.eye(N, dtype=jnp.float32), 1.0)

    params = init_gcn_params(kp, IN_CH, HIDDEN, OUT_CH, NUM_LAYERS)

    # One-time preparation (padding + bf16 casts) kept OUT of the per-call path
    # so the N^2 f32->bf16 adjacency convert is not re-paid every forward.
    f_pad = _feature_pad(params)
    w_stack, b_stack = prepare_gcn_params(params, f_pad)
    x_p, a_p = prepare_gcn_inputs(x, adj_t, f_pad)

    fwd = jax.jit(functools.partial(
        gcn_forward_padded, out_ch=OUT_CH, n_valid=N, if_auc=IF_AUC))
    out = jax.block_until_ready(fwd(w_stack, b_stack, x_p, a_p))

    assert out.shape == (N, OUT_CH)
    # log_softmax rows should sum (in prob space) to ~1 (bf16 output storage).
    assert jnp.allclose(jnp.sum(jnp.exp(out), axis=-1), 1.0, atol=3e-2)

    ref = reference_forward(params, x, adj_t, if_auc=IF_AUC)
    assert jnp.allclose(out, ref, atol=3e-2, rtol=3e-2), "fused path mismatch"

    # Also exercise the size-guarded row-tiled per-layer fallback (large-N/v7x).
    fwd_tiled = jax.jit(functools.partial(
        gcn_forward_padded, out_ch=OUT_CH, n_valid=N, if_auc=IF_AUC,
        force_row_tiled=True))
    out_tiled = jax.block_until_ready(fwd_tiled(w_stack, b_stack, x_p, a_p))
    assert jnp.allclose(out_tiled, ref, atol=3e-2, rtol=3e-2), "tiled path mismatch"

    print("KERNEL_OK")
</pallas_src>

<mosaic_0001>
module attributes {stable_mosaic.version = 11 : i64} {
  func.func @fused_gcn_kernel(%arg0: i32, %arg1: memref<128x128xbf16, #tpu.memory_space<vmem>>, %arg2: memref<128x128xbf16, #tpu.memory_space<any>>, %arg3: memref<1x128x128xbf16, #tpu.memory_space<vmem>>, %arg4: memref<1x1x128xf32, #tpu.memory_space<vmem>>, %arg5: memref<128x128xbf16, #tpu.memory_space<vmem>>, %arg6: memref<128x128xbf16, #tpu.memory_space<vmem>>) attributes {dimension_semantics = [#tpu.dimension_semantics<arbitrary>], iteration_bounds = array<i64: 3>, scalar_prefetch = 0 : i64, scratch_operands = 1 : i64, tpu.core_type = #tpu.core_type<tc>, window_params = [{pipeline_mode = #tpu.pipeline_mode<synchronous>, transform_indices = @transform_0, window_bounds = array<i64: 128, 128>}, {}, {transform_indices = @transform_2, window_bounds = array<i64: 1, 128, 128>}, {transform_indices = @transform_3, window_bounds = array<i64: 1, 1, 128>}, {pipeline_mode = #tpu.pipeline_mode<synchronous>, transform_indices = @transform_4, window_bounds = array<i64: 128, 128>}]} {
    %c0_i32 = arith.constant 0 : i32
    %0 = arith.cmpi eq, %arg0, %c0_i32 : i32
    %1 = arith.extui %0 : i1 to i32
    %c0_i32_0 = arith.constant 0 : i32
    %2 = arith.cmpi ne, %1, %c0_i32_0 : i32
    scf.if %2 {
      "tpu.region"() ({
        %20 = tpu.sem_alloc : memref<!tpu.dma_semaphore, #tpu.memory_space<semaphore_mem>>
        tpu.enqueue_dma source(%arg2 : memref<128x128xbf16, #tpu.memory_space<any>>) target(%arg6 : memref<128x128xbf16, #tpu.memory_space<vmem>>) target_semaphore(%20 : memref<!tpu.dma_semaphore, #tpu.memory_space<semaphore_mem>>)
        tpu.wait_dma2 semaphore(%20 : memref<!tpu.dma_semaphore, #tpu.memory_space<semaphore_mem>>) src(%arg2 : memref<128x128xbf16, #tpu.memory_space<any>>) dst(%arg6 : memref<128x128xbf16, #tpu.memory_space<vmem>>)
        tpu.yield
      }) : () -> ()
    } else {
    }
    %c0 = arith.constant 0 : index
    %c0_1 = arith.constant 0 : index
    %3 = vector.load %arg6[%c0, %c0_1] : memref<128x128xbf16, #tpu.memory_space<vmem>>, vector<128x128xbf16>
    %c0_2 = arith.constant 0 : index
    %c0_3 = arith.constant 0 : index
    %c0_4 = arith.constant 0 : index
    %4 = vector.load %arg3[%c0_2, %c0_3, %c0_4] : memref<1x128x128xbf16, #tpu.memory_space<vmem>>, vector<1x128x128xbf16>
    %5 = vector.shape_cast %4 : vector<1x128x128xbf16> to vector<128x128xbf16>
    %cst = arith.constant dense<0.000000e+00> : vector<128x128xf32>
    %6 = tpu.matmul %3, %5, %cst {dimension_numbers = #tpu.dot_dimension_numbers<[1], [0], [0], [1], [0, 0, 1, 1], [], []>} : vector<128x128xbf16>, vector<128x128xbf16>, vector<128x128xf32> -> vector<128x128xf32>
    %c0_5 = arith.constant 0 : index
    %c0_6 = arith.constant 0 : index
    %7 = vector.load %arg1[%c0_5, %c0_6] : memref<128x128xbf16, #tpu.memory_space<vmem>>, vector<128x128xbf16>
    %8 = arith.truncf %6 : vector<128x128xf32> to vector<128x128xbf16>
    %cst_7 = arith.constant dense<0.000000e+00> : vector<128x128xf32>
    %9 = tpu.matmul %7, %8, %cst_7 {dimension_numbers = #tpu.dot_dimension_numbers<[1], [0], [0], [1], [0, 0, 1, 1], [], []>} : vector<128x128xbf16>, vector<128x128xbf16>, vector<128x128xf32> -> vector<128x128xf32>
    %c0_8 = arith.constant 0 : index
    %c0_9 = arith.constant 0 : index
    %c0_10 = arith.constant 0 : index
    %10 = vector.load %arg4[%c0_8, %c0_9, %c0_10] : memref<1x1x128xf32, #tpu.memory_space<vmem>>, vector<1x1x128xf32>
    %11 = vector.shape_cast %10 : vector<1x1x128xf32> to vector<1x128xf32>
    %12 = vector.broadcast %11 : vector<1x128xf32> to vector<128x128xf32>
    %13 = arith.addf %9, %12 : vector<128x128xf32>
    %c2_i32 = arith.constant 2 : i32
    %14 = arith.cmpi eq, %arg0, %c2_i32 : i32
    %true = arith.constant true
    %15 = arith.xori %14, %true : i1
    %16 = arith.extui %15 : i1 to i32
    %c0_i32_11 = arith.constant 0 : i32
    %17 = arith.cmpi ne, %16, %c0_i32_11 : i32
    scf.if %17 {
      %cst_13 = arith.constant 0.000000e+00 : f32
      %20 = vector.broadcast %cst_13 : f32 to vector<128x128xf32>
      %21 = arith.maximumf %13, %20 : vector<128x128xf32>
      %22 = arith.truncf %21 : vector<128x128xf32> to vector<128x128xbf16>
      %c0_14 = arith.constant 0 : index
      %c0_15 = arith.constant 0 : index
      %23 = vector.load %arg6[%c0_14, %c0_15] : memref<128x128xbf16, #tpu.memory_space<vmem>>, vector<128x128xbf16>
      tpu.vector_store %arg6[%c0_14, %c0_15], %22 {strides = array<i32>} : memref<128x128xbf16, #tpu.memory_space<vmem>>, vector<128x128xbf16>,
    } else {
    }
    %18 = arith.extui %14 : i1 to i32
    %c0_i32_12 = arith.constant 0 : i32
    %19 = arith.cmpi ne, %18, %c0_i32_12 : i32
    scf.if %19 {
      %20 = tpu.iota {dimensions = array<i32: 1>} : vector<128x128xi32>
      %c8_i32 = arith.constant 8 : i32
      %21 = vector.broadcast %c8_i32 : i32 to vector<128x128xi32>
      %22 = arith.cmpi slt, %20, %21 : vector<128x128xi32>
      %cst_13 = arith.constant -1.000000e+30 : f32
      %23 = vector.broadcast %cst_13 : f32 to vector<128x128xf32>
      %24 = arith.select %22, %13, %23 : vector<128x128xi1>, vector<128x128xf32>
      %cst_14 = arith.constant dense<0xFF800000> : vector<128xf32>
      %25 = vector.multi_reduction <maximumf>, %24, %cst_14 [1] : vector<128x128xf32> to vector<128xf32>
      %26 = vector.shape_cast %25 : vector<128xf32> to vector<128x1xf32>
      %27 = vector.broadcast %26 : vector<128x1xf32> to vector<128x128xf32>
      %28 = arith.subf %24, %27 : vector<128x128xf32>
      %29 = math.exp %28 : vector<128x128xf32>
      %cst_15 = arith.constant 0.000000e+00 : f32
      %30 = vector.broadcast %cst_15 : f32 to vector<128x128xf32>
      %31 = arith.select %22, %29, %30 : vector<128x128xi1>, vector<128x128xf32>
      %cst_16 = arith.constant dense<0.000000e+00> : vector<128xf32>
      %32 = vector.multi_reduction <add>, %31, %cst_16 [1] : vector<128x128xf32> to vector<128xf32>
      %33 = vector.shape_cast %32 : vector<128xf32> to vector<128x1xf32>
      %34 = math.log %33 : vector<128x1xf32>
      %35 = vector.broadcast %34 : vector<128x1xf32> to vector<128x128xf32>
      %36 = arith.subf %28, %35 : vector<128x128xf32>
      %cst_17 = arith.constant 0.000000e+00 : f32
      %37 = vector.broadcast %cst_17 : f32 to vector<128x128xf32>
      %38 = arith.select %22, %36, %37 : vector<128x128xi1>, vector<128x128xf32>
      %39 = arith.truncf %38 : vector<128x128xf32> to vector<128x128xbf16>
      %c0_18 = arith.constant 0 : index
      %c0_19 = arith.constant 0 : index
      %40 = vector.load %arg5[%c0_18, %c0_19] : memref<128x128xbf16, #tpu.memory_space<vmem>>, vector<128x128xbf16>
      tpu.vector_store %arg5[%c0_18, %c0_19], %39 {strides = array<i32>} : memref<128x128xbf16, #tpu.memory_space<vmem>>, vector<128x128xbf16>,
    } else {
    }
    return
  }
  func.func @transform_0(%arg0: i32) -> (i32, i32) {
    %c0_i32 = arith.constant 0 : i32
    %c0_i32_0 = arith.constant 0 : i32
    %c0_i32_1 = arith.constant 0 : i32
    return %c0_i32, %c0_i32_0 : i32, i32
  }
  func.func @transform_2(%arg0: i32) -> (i32, i32, i32) {
    %c0_i32 = arith.constant 0 : i32
    %c0_i32_0 = arith.constant 0 : i32
    %c0_i32_1 = arith.constant 0 : i32
    return %arg0, %c0_i32, %c0_i32_0 : i32, i32, i32
  }
  func.func @transform_3(%arg0: i32) -> (i32, i32, i32) {
    %c0_i32 = arith.constant 0 : i32
    %c0_i32_0 = arith.constant 0 : i32
    %c0_i32_1 = arith.constant 0 : i32
    return %arg0, %c0_i32, %c0_i32_0 : i32, i32, i32
  }
  func.func @transform_4(%arg0: i32) -> (i32, i32) {
    %c0_i32 = arith.constant 0 : i32
    %c0_i32_0 = arith.constant 0 : i32
    %c0_i32_1 = arith.constant 0 : i32
    return %c0_i32, %c0_i32_0 : i32, i32
  }
}

</mosaic_0001>

<llo_original>
// kernel: gcn_forward_padded.1
$region0: #{gcn_forward_padded.1}
  #allocation0 [shape = 'u32[]', space=smem, size = 0x4, offset = 0x4, fixed_abs, tag = 'smem constant byte address 0x4 - core index']
  #allocation1 [shape = 'u32[72,128]{1,0:T(1,128)}', space=vmem, size = 0x9000, scoped, tag = 'internal scratch']
  #allocation2 [shape = 'bf16[128,128]{1,0:T(8,128)(2,1)}', space=vmem, size = 0x8000, scoped, tag = 'scratch operand']
  #allocation9 [shape = 's32[]', space=sflag, size = 0x4, offset = 0, fixed_abs, tag = 'sflag constant byte address 0x0 - dummy sync flag']
  #allocation10 [shape = 's32[]', space=sflag, size = 0x4, offset = 0, fixed_abs, tag = 'sflag constant byte address 0x0 - dummy sync flag']
  #allocation11 [shape = 'u32[]', space=smem, size = 0x4, offset = 0x44, fixed_abs, tag = 'smem constant byte address 0x44 - assertion arg 0']
  #allocation12 [shape = 'u32[]', space=smem, size = 0x4, offset = 0x48, fixed_abs, tag = 'smem constant byte address 0x48 - assertion arg 1']
  %s0 = inlined_call_operand.hbm [shape: bf16[128,128], index: 0, kind: input, shape index: {}]
  %s1 = inlined_call_operand.hbm [shape: bf16[128,128], index: 1, kind: input, shape index: {}]
  %s2 = inlined_call_operand.hbm [shape: bf16[3,128,128], index: 2, kind: input, shape index: {}]
  %s3 = inlined_call_operand.hbm [shape: f32[3,1,128], index: 3, kind: input, shape index: {}]
  %s4 = inlined_call_operand.vmem [shape: bf16[128,128], index: 4, kind: output, shape index: {}]
  %s5 = sld [smem:[#allocation0]]
  $region74: #{gcn_forward_padded.1} parent=0
    _
  %s7 = ssub.s32 1, %s5
  %s8 = scalar_select 0, %s7, %s5
  $region1: #{gcn_forward_padded.1} parent=0
    #allocation3 [shape = 'u8[32768]{0}', space=vmem, size = 0x8000, scoped, tag = 'input window, operand 0, single buffered']
    #allocation4 [shape = 's32[2]{0}', space=sflag, size = 0x8, scoped, tag = 'scoped memory for gcn_forward_padded.1']
    #allocation5 [shape = 'u8[65536]{0}', space=vmem, size = 0x10000, scoped, tag = 'input window, operand 2']
    #allocation6 [shape = 's32[2]{0}', space=sflag, size = 0x8, scoped, tag = 'scoped memory for gcn_forward_padded.1']
    #allocation7 [shape = 'u8[1024]{0}', space=vmem, size = 0x400, scoped, tag = 'input window, operand 3']
    %9 = vsyncpa [#allocation4], 0
    %10 = vsyncpa [#allocation6], 0
    %s11 = scalar_lea.sflag [#allocation6], 1
    %12 = vsyncpa %s11, 0
    loop: start=0, step=1, limit=5
    $region2: #{gcn_forward_padded.1} parent=1 // loop_pre_header
      _
    $region3: #{gcn_forward_padded.1} parent=1 // loop_header
      %s14 = sphi 0, %s18
      %p15 = scmp.ge.s32.totalorder %s14, 5
      %s22 = sphi 0, %s22
      %s24 = sphi 0, %s22
      %s25 = sphi 0, %s24
      %s39 = sphi 0, %s25
      %s45 = sphi 0, %s47
      %s48 = sphi 0, %s45
      %s49 = sphi 0, %s48
      %s65 = sphi 0, %s49
      %s71 = sphi 0, %s73
      %s74 = sphi 0, %s71
      %s75 = sphi 0, %s74
      %s91 = sphi 0, %s75
      %s95 = sphi 0, %s95
      %s97 = sphi 0, %s95
      %s98 = sphi 0, %s97
      %s112 = sphi 0, %s98
    $region4: #{gcn_forward_padded.1} parent=1 // loop_header_branch
      %17 = sbr.rel (%p15) target = $region8
    $region5: #{gcn_forward_padded.1} parent=1 // loop_body
      %s19 = ssub.s32 %s14, 1
      %s20 = ssub.s32 %s14, 2
      %s21 = sadd.s32 %s14, 1
      %s23 = sadd.s32 %s22, 1
      %p26 = scmp.eq.s32.totalorder %s14, 2
      %p27 = scmp.ne.s32.totalorder %s22, %s24
      %p28 = scmp.eq.s32.totalorder %s14, 0
      %p29 = por %p27, %p28
      %p30 = scmp.ne.s32.totalorder %s22, %s24
      %p31 = scmp.eq.s32.totalorder %s19, 2
      %p32 = por %p30, %p31
      %p33 = scmp.ne.s32.totalorder %s24, %s25
      %p34 = scmp.eq.s32.totalorder %s19, 0
      %p35 = por %p33, %p34
      %p36 = scmp.ne.s32.totalorder %s24, %s25
      %p37 = scmp.eq.s32.totalorder %s20, 2
      %p38 = por %p36, %p37
      %p40 = scmp.ne.s32.totalorder %s25, %s39
      %p41 = scmp.eq.s32.totalorder %s20, 0
      %p42 = por %p40, %p41
      %s43 = ssub.s32 %s14, %s21
      %p44 = scmp.eq.s32.totalorder %s43, 0
      %s46 = sadd.s32 %s45, 1
      %s47 = scalar_select %p44, %s45, %s46
      %p50 = pneg %p44
      %p51 = scmp.eq.s32.totalorder %s14, 2
      %p52 = por %p50, %p51
      %p53 = scmp.ne.s32.totalorder %s45, %s48
      %p54 = scmp.eq.s32.totalorder %s14, 0
      %p55 = por %p53, %p54
      %p56 = scmp.ne.s32.totalorder %s45, %s48
      %p57 = scmp.eq.s32.totalorder %s19, 2
      %p58 = por %p56, %p57
      %p59 = scmp.ne.s32.totalorder %s48, %s49
      %p60 = scmp.eq.s32.totalorder %s19, 0
      %p61 = por %p59, %p60
      %p62 = scmp.ne.s32.totalorder %s48, %s49
      %p63 = scmp.eq.s32.totalorder %s20, 2
      %p64 = por %p62, %p63
      %p66 = scmp.ne.s32.totalorder %s49, %s65
      %p67 = scmp.eq.s32.totalorder %s20, 0
      %p68 = por %p66, %p67
      %s69 = ssub.s32 %s14, %s21
      %p70 = scmp.eq.s32.totalorder %s69, 0
      %s72 = sadd.s32 %s71, 1
      %s73 = scalar_select %p70, %s71, %s72
      %p76 = pneg %p70
      %p77 = scmp.eq.s32.totalorder %s14, 2
      %p78 = por %p76, %p77
      %p79 = scmp.ne.s32.totalorder %s71, %s74
      %p80 = scmp.eq.s32.totalorder %s14, 0
      %p81 = por %p79, %p80
      %p82 = scmp.ne.s32.totalorder %s71, %s74
      %p83 = scmp.eq.s32.totalorder %s19, 2
      %p84 = por %p82, %p83
      %p85 = scmp.ne.s32.totalorder %s74, %s75
      %p86 = scmp.eq.s32.totalorder %s19, 0
      %p87 = por %p85, %p86
      %p88 = scmp.ne.s32.totalorder %s74, %s75
      %p89 = scmp.eq.s32.totalorder %s20, 2
      %p90 = por %p88, %p89
      %p92 = scmp.ne.s32.totalorder %s75, %s91
      %p93 = scmp.eq.s32.totalorder %s20, 0
      %p94 = por %p92, %p93
      %s96 = sadd.s32 %s95, 1
      %p99 = scmp.eq.s32.totalorder %s14, 2
      %p100 = scmp.ne.s32.totalorder %s95, %s97
      %p101 = scmp.eq.s32.totalorder %s14, 0
      %p102 = por %p100, %p101
      %p103 = scmp.ne.s32.totalorder %s95, %s97
      %p104 = scmp.eq.s32.totalorder %s19, 2
      %p105 = por %p103, %p104
      %p106 = scmp.ne.s32.totalorder %s97, %s98
      %p107 = scmp.eq.s32.totalorder %s19, 0
      %p108 = por %p106, %p107
      %p109 = scmp.ne.s32.totalorder %s97, %s98
      %p110 = scmp.eq.s32.totalorder %s20, 2
      %p111 = por %p109, %p110
      %p113 = scmp.ne.s32.totalorder %s98, %s112
      %p114 = scmp.eq.s32.totalorder %s20, 0
      %p115 = por %p113, %p114
      %p116 = scmp.le.s32.totalorder 1, %s14
      %p117 = scmp.lt.s32.totalorder %s14, 4
      %p118 = pnand %p116, %p117
      %p119 = pneg %p118
      // Predicated region
      $region9: #{gcn_forward_padded.1} parent=5 // pred_check
        _
      $region10: #{gcn_forward_padded.1} parent=5 // pred_check_branch
        %121 = sbr.rel (%p118) target = $region12
      $region11: #{gcn_forward_padded.1} parent=5 // pred_region
        %s122 = ssub.s32 %s14, 1
        // Predicated region
        $region13: #{gcn_forward_padded.1} parent=11 // pred_check
          %p123 = pneg %p35
        $region14: #{gcn_forward_padded.1} parent=11 // pred_check_branch
          %125 = sbr.rel (%p123) target = $region16
        $region15: #{gcn_forward_padded.1} parent=11 // pred_region
          %127 = vsyncadd [#allocation4], 0
          %s128 = sshll.u32 %s0, 4
          %s129 = int_to_ptr.hbm [resolvable:$true] %s128
          %s130 = sshll.u32 [#allocation3], 4
          %s131 = int_to_ptr.vmem [resolvable:$true] %s130
          %136 = dma.hbm_to_vmem [thread:$0]  %s129, 1024, %s131, [#allocation4], 64, 64, 4
        $region16: #{gcn_forward_padded.1} parent=11 // pred_fallthru
          _
      $region12: #{gcn_forward_padded.1} parent=5 // pred_fallthru
        _
      %p137 = scmp.lt.s32.totalorder %s14, 3
      // Predicated region
      $region17: #{gcn_forward_padded.1} parent=5 // pred_check
        %p138 = pneg %p137
      $region18: #{gcn_forward_padded.1} parent=5 // pred_check_branch
        %140 = sbr.rel (%p138) target = $region20
      $region19: #{gcn_forward_padded.1} parent=5 // pred_region
        // Predicated region
        $region21: #{gcn_forward_padded.1} parent=19 // pred_check
          %p141 = pneg %p55
        $region22: #{gcn_forward_padded.1} parent=19 // pred_check_branch
          %143 = sbr.rel (%p141) target = $region24
        $region23: #{gcn_forward_padded.1} parent=19 // pred_region
          %s144 = sand.u32 %s14, 1
          %s145 = scalar_lea.sflag [#allocation6], %s144
          %s146 = sand.u32 %s45, 1
          %s147 = smul.addr %s146, 64
          %s148 = scalar_lea.vmem [#allocation5], %s147
          %150 = vsyncadd %s145, 0
          %s151 = smul.addr %s14, 16
          %s152 = smul.addr %s151, 4
          %s153 = scalar_lea.hbm %s2, %s152
          %s154 = sshll.u32 %s153, 4
          %s155 = int_to_ptr.hbm [resolvable:$true] %s154
          %s156 = sshll.u32 %s148, 4
          %s157 = int_to_ptr.vmem [resolvable:$true] %s156
          %162 = dma.hbm_to_vmem [thread:$0]  %s155, 1024, %s157, %s145, 64, 64, 4
        $region24: #{gcn_forward_padded.1} parent=19 // pred_fallthru
          _
        // Predicated region
        $region25: #{gcn_forward_padded.1} parent=19 // pred_check
          %p163 = pneg %p81
        $region26: #{gcn_forward_padded.1} parent=19 // pred_check_branch
          %165 = sbr.rel (%p163) target = $region28
        $region27: #{gcn_forward_padded.1} parent=19 // pred_region
          %s166 = sand.u32 %s14, 1
          %s167 = scalar_lea.sflag [#allocation6], %s166
          %s168 = sand.u32 %s71, 1
          %s169 = scalar_lea.vmem [#allocation7], %s168
          %171 = vsyncadd %s167, 0
          %s172 = scalar_lea.hbm %s3, %s14
          %s174 = sshll.u32 %s172, 4
          %s175 = int_to_ptr.hbm [resolvable:$true] %s174
          %s176 = sshll.u32 %s169, 4
          %s177 = int_to_ptr.vmem [resolvable:$true] %s176
          %179 = dma.hbm_to_vmem [thread:$0]  %s175, 16, %s177, %s167
        $region28: #{gcn_forward_padded.1} parent=19 // pred_fallthru
          _
      $region20: #{gcn_forward_padded.1} parent=5 // pred_fallthru
        _
      %p180 = scmp.le.s32.totalorder 1, %s14
      %p181 = scmp.lt.s32.totalorder %s14, 4
      %p182 = pnand %p180, %p181
      %p183 = pneg %p182
      // Predicated region
      $region29: #{gcn_forward_padded.1} parent=5 // pred_check
        _
      $region30: #{gcn_forward_padded.1} parent=5 // pred_check_branch
        %185 = sbr.rel (%p182) target = $region32
      $region31: #{gcn_forward_padded.1} parent=5 // pred_region
        %s186 = ssub.s32 %s14, 1
        // Predicated region
        $region33: #{gcn_forward_padded.1} parent=31 // pred_check
          %p187 = pneg %p35
        $region34: #{gcn_forward_padded.1} parent=31 // pred_check_branch
          %189 = sbr.rel (%p187) target = $region36
        $region35: #{gcn_forward_padded.1} parent=31 // pred_region
          %191 = dma.done [#allocation4], 1024
        $region36: #{gcn_forward_padded.1} parent=31 // pred_fallthru
          _
        %s192 = sand.u32 %s19, 1
        %s193 = scalar_lea.sflag [#allocation6], %s192
        %s194 = sand.u32 %s48, 1
        %s195 = smul.addr %s194, 64
        %s196 = scalar_lea.vmem [#allocation5], %s195
        // Predicated region
        $region37: #{gcn_forward_padded.1} parent=31 // pred_check
          %p197 = pneg %p61
        $region38: #{gcn_forward_padded.1} parent=31 // pred_check_branch
          %199 = sbr.rel (%p197) target = $region40
        $region39: #{gcn_forward_padded.1} parent=31 // pred_region
          %201 = dma.done %s193, 1024
        $region40: #{gcn_forward_padded.1} parent=31 // pred_fallthru
          _
        %s202 = sand.u32 %s19, 1
        %s203 = scalar_lea.sflag [#allocation6], %s202
        %s204 = sand.u32 %s74, 1
        %s205 = scalar_lea.vmem [#allocation7], %s204
        // Predicated region
        $region41: #{gcn_forward_padded.1} parent=31 // pred_check
          %p206 = pneg %p87
        $region42: #{gcn_forward_padded.1} parent=31 // pred_check_branch
          %208 = sbr.rel (%p206) target = $region44
        $region43: #{gcn_forward_padded.1} parent=31 // pred_region
          %210 = dma.done %s203, 16
        $region44: #{gcn_forward_padded.1} parent=31 // pred_fallthru
          _
        %p211 = pneg %p35
        %p212 = pneg %p32
        %s213 = sand.u32 %s19, 1
        %s214 = scalar_lea.sflag [#allocation6], %s213
        %s215 = sand.u32 %s48, 1
        %s216 = smul.addr %s215, 64
        %s217 = scalar_lea.vmem [#allocation5], %s216
        %p218 = pneg %p61
        %p219 = pneg %p58
        %s220 = sand.u32 %s19, 1
        %s221 = scalar_lea.sflag [#allocation6], %s220
        %s222 = sand.u32 %s74, 1
        %s223 = scalar_lea.vmem [#allocation7], %s222
        %p224 = pneg %p87
        %p225 = pneg %p84
        %p226 = pneg %p108
        %p227 = pneg %p105
        %p228 = scmp.eq.s32.totalorder %s19, 0
        // Predicated region
        $region45: #{gcn_forward_padded.1} parent=31 // pred_check
          %p229 = pneg %p228
        $region46: #{gcn_forward_padded.1} parent=31 // pred_check_branch
          %231 = sbr.rel (%p229) target = $region48
        $region47: #{gcn_forward_padded.1} parent=31 // pred_region
          $region49: #{gcn_forward_padded.1} parent=47
            #allocation8 [shape = 's32[1]{0}', space=sflag, size = 0x4, scoped, tag = 'scoped memory for gcn_forward_padded.1']
            // Predicated region
            $region50: #{gcn_forward_padded.1} parent=49 // pred_check
              _
            $region51: #{gcn_forward_padded.1} parent=49 // pred_check_branch
              %233 = sbr.rel target = $region53
            $region52: #{gcn_forward_padded.1} parent=49 // pred_region
              %234 = sst [smem:[#allocation11]] [#allocation10]
              %235 = sst [smem:[#allocation12]] [#allocation9]
            $region53: #{gcn_forward_padded.1} parent=49 // pred_fallthru
              _
            %237 = shalt.err (0)
            %s239 = sshll.u32 %s1, 4
            %s240 = int_to_ptr.hbm [resolvable:$true] %s239
            %s241 = sshll.u32 [#allocation2], 4
            %s242 = int_to_ptr.vmem [resolvable:$true] %s241
            %244 = dma.hbm_to_vmem [thread:$0]  %s240, 1024, %s242, [#allocation8]
            %s245 = smul.u32 4, 16
            %s246 = smul.u32 %s245, 1
            %s247 = sshll.u32 %s246, 4
            %248 = dma.done [#allocation8], %s247
        $region48: #{gcn_forward_padded.1} parent=31 // pred_fallthru
          _
        %v249 = vld [vmem:[#allocation2] sm:$0xf]
        %v250 = vld [vmem:[#allocation2 + $0x4] sm:$0xf]
        %v251 = vld [vmem:[#allocation2 + $0x8] sm:$0xf]
        %v252 = vld [vmem:[#allocation2 + $0xc] sm:$0xf]
        %v253 = vld [vmem:[#allocation2 + $0x10] sm:$0xf]
        %v254 = vld [vmem:[#allocation2 + $0x14] sm:$0xf]
        %v255 = vld [vmem:[#allocation2 + $0x18] sm:$0xf]
        %v256 = vld [vmem:[#allocation2 + $0x1c] sm:$0xf]
        %v257 = vld [vmem:[#allocation2 + $0x20] sm:$0xf]
        %v258 = vld [vmem:[#allocation2 + $0x24] sm:$0xf]
        %v259 = vld [vmem:[#allocation2 + $0x28] sm:$0xf]
        %v260 = vld [vmem:[#allocation2 + $0x2c] sm:$0xf]
        %v261 = vld [vmem:[#allocation2 + $0x30] sm:$0xf]
        %v262 = vld [vmem:[#allocation2 + $0x34] sm:$0xf]
        %v263 = vld [vmem:[#allocation2 + $0x38] sm:$0xf]
        %v264 = vld [vmem:[#allocation2 + $0x3c] sm:$0xf]
        %v265 = vld [vmem:[%s196] sm:$0xf]
        %v266 = vld [vmem:[%s196 + $0x4] sm:$0xf]
        %v267 = vld [vmem:[%s196 + $0x8] sm:$0xf]
        %v268 = vld [vmem:[%s196 + $0xc] sm:$0xf]
        %v269 = vld [vmem:[%s196 + $0x10] sm:$0xf]
        %v270 = vld [vmem:[%s196 + $0x14] sm:$0xf]
        %v271 = vld [vmem:[%s196 + $0x18] sm:$0xf]
        %v272 = vld [vmem:[%s196 + $0x1c] sm:$0xf]
        %v273 = vld [vmem:[%s196 + $0x20] sm:$0xf]
        %v274 = vld [vmem:[%s196 + $0x24] sm:$0xf]
        %v275 = vld [vmem:[%s196 + $0x28] sm:$0xf]
        %v276 = vld [vmem:[%s196 + $0x2c] sm:$0xf]
        %v277 = vld [vmem:[%s196 + $0x30] sm:$0xf]
        %v278 = vld [vmem:[%s196 + $0x34] sm:$0xf]
        %v279 = vld [vmem:[%s196 + $0x38] sm:$0xf]
        %v280 = vld [vmem:[%s196 + $0x3c] sm:$0xf]
        %v297 = vunpack.c.l.b16 %v249
        %v298 = vunpack.c.l.b16 %v250
        %v299 = vunpack.c.l.b16 %v251
        %v300 = vunpack.c.l.b16 %v252
        %v301 = vunpack.c.l.b16 %v253
        %v302 = vunpack.c.l.b16 %v254
        %v303 = vunpack.c.l.b16 %v255
        %v304 = vunpack.c.l.b16 %v256
        %v305 = vunpack.c.l.b16 %v257
        %v306 = vunpack.c.l.b16 %v258
        %v307 = vunpack.c.l.b16 %v259
        %v308 = vunpack.c.l.b16 %v260
        %v309 = vunpack.c.l.b16 %v261
        %v310 = vunpack.c.l.b16 %v262
        %v311 = vunpack.c.l.b16 %v263
        %v312 = vunpack.c.l.b16 %v264
        %v313 = vpack.c.b16 %v298, %v297
        %v314 = vpack.c.b16 %v300, %v299
        %v315 = vpack.c.b16 %v302, %v301
        %v316 = vpack.c.b16 %v304, %v303
        %v317 = vpack.c.b16 %v306, %v305
        %v318 = vpack.c.b16 %v308, %v307
        %v319 = vpack.c.b16 %v310, %v309
        %v320 = vpack.c.b16 %v312, %v311
        %v345 = vunpack.c.l.b16 %v265
        %v346 = vunpack.c.l.b16 %v266
        %v347 = vunpack.c.l.b16 %v267
        %v348 = vunpack.c.l.b16 %v268
        %v349 = vunpack.c.l.b16 %v269
        %v350 = vunpack.c.l.b16 %v270
        %v351 = vunpack.c.l.b16 %v271
        %v352 = vunpack.c.l.b16 %v272
        %v353 = vunpack.c.l.b16 %v273
        %v354 = vunpack.c.l.b16 %v274
        %v355 = vunpack.c.l.b16 %v275
        %v356 = vunpack.c.l.b16 %v276
        %v357 = vunpack.c.l.b16 %v277
        %v358 = vunpack.c.l.b16 %v278
        %v359 = vunpack.c.l.b16 %v279
        %v360 = vunpack.c.l.b16 %v280
        %v361 = vpack.c.b16 %v346, %v345
        %v362 = vpack.c.b16 %v348, %v347
        %v363 = vpack.c.b16 %v350, %v349
        %v364 = vpack.c.b16 %v352, %v351
        %v365 = vpack.c.b16 %v354, %v353
        %v366 = vpack.c.b16 %v356, %v355
        %v367 = vpack.c.b16 %v358, %v357
        %v368 = vpack.c.b16 %v360, %v359
        %377 = vmatpush.bf16.msra.mxu0 %v368
        %378 = vmatpush.bf16.msra.mxu0 %v367
        %379 = vmatpush.bf16.msra.mxu0 %v366
        %380 = vmatpush.bf16.msra.mxu0 %v365
        %381 = vmatpush.bf16.msra.mxu0 %v364
        %382 = vmatpush.bf16.msra.mxu0 %v363
        %383 = vmatpush.bf16.msra.mxu0 %v362
        %384 = vmatpush.bf16.msra.mxu0 %v361
        %385 = vmatmul.bf16.gmra.mxu0 %v313
        %v386 = vpop.f32.mrf.mxu0
        %v387 = vadd.f32 0.0, %v386
        %v388 = vpop.f32.mrf.mxu0
        %v389 = vadd.f32 0.0, %v388
        %390 = vmatmul.bf16.gmra.mxu0 %v314
        %v391 = vpop.f32.mrf.mxu0
        %v392 = vadd.f32 0.0, %v391
        %v393 = vpop.f32.mrf.mxu0
        %v394 = vadd.f32 0.0, %v393
        %395 = vmatmul.bf16.gmra.mxu0 %v315
        %v396 = vpop.f32.mrf.mxu0
        %v397 = vadd.f32 0.0, %v396
        %v398 = vpop.f32.mrf.mxu0
        %v399 = vadd.f32 0.0, %v398
        %400 = vmatmul.bf16.gmra.mxu0 %v316
        %v401 = vpop.f32.mrf.mxu0
        %v402 = vadd.f32 0.0, %v401
        %v403 = vpop.f32.mrf.mxu0
        %v404 = vadd.f32 0.0, %v403
        %405 = vmatmul.bf16.gmra.mxu0 %v317
        %v406 = vpop.f32.mrf.mxu0
        %v407 = vadd.f32 0.0, %v406
        %v408 = vpop.f32.mrf.mxu0
        %v409 = vadd.f32 0.0, %v408
        %410 = vmatmul.bf16.gmra.mxu0 %v318
        %v411 = vpop.f32.mrf.mxu0
        %v412 = vadd.f32 0.0, %v411
        %v413 = vpop.f32.mrf.mxu0
        %v414 = vadd.f32 0.0, %v413
        %415 = vmatmul.bf16.gmra.mxu0 %v319
        %v416 = vpop.f32.mrf.mxu0
        %v417 = vadd.f32 0.0, %v416
        %v418 = vpop.f32.mrf.mxu0
        %v419 = vadd.f32 0.0, %v418
        %420 = vmatmul.bf16.gmra.mxu0 %v320
        %v421 = vpop.f32.mrf.mxu0
        %v422 = vadd.f32 0.0, %v421
        %v423 = vpop.f32.mrf.mxu0
        %v424 = vadd.f32 0.0, %v423
        %425 = vdwg.mxu0
        %v426 = vld [vmem:[#allocation3] sm:$0xf]
        %v427 = vld [vmem:[#allocation3 + $0x4] sm:$0xf]
        %v428 = vld [vmem:[#allocation3 + $0x8] sm:$0xf]
        %v429 = vld [vmem:[#allocation3 + $0xc] sm:$0xf]
        %v430 = vld [vmem:[#allocation3 + $0x10] sm:$0xf]
        %v431 = vld [vmem:[#allocation3 + $0x14] sm:$0xf]
        %v432 = vld [vmem:[#allocation3 + $0x18] sm:$0xf]
        %v433 = vld [vmem:[#allocation3 + $0x1c] sm:$0xf]
        %v434 = vld [vmem:[#allocation3 + $0x20] sm:$0xf]
        %v435 = vld [vmem:[#allocation3 + $0x24] sm:$0xf]
        %v436 = vld [vmem:[#allocation3 + $0x28] sm:$0xf]
        %v437 = vld [vmem:[#allocation3 + $0x2c] sm:$0xf]
        %v438 = vld [vmem:[#allocation3 + $0x30] sm:$0xf]
        %v439 = vld [vmem:[#allocation3 + $0x34] sm:$0xf]
        %v440 = vld [vmem:[#allocation3 + $0x38] sm:$0xf]
        %v441 = vld [vmem:[#allocation3 + $0x3c] sm:$0xf]
        %v442 = vpack.c.bf16 %v389, %v387
        %v443 = vpack.c.bf16 %v394, %v392
        %v444 = vpack.c.bf16 %v399, %v397
        %v445 = vpack.c.bf16 %v404, %v402
        %v446 = vpack.c.bf16 %v409, %v407
        %v447 = vpack.c.bf16 %v414, %v412
        %v448 = vpack.c.bf16 %v419, %v417
        %v449 = vpack.c.bf16 %v424, %v422
        %v450 = vld [vmem:[%s205] sm:$0x1]
        %v452 = vperm.slane %v450, 0
        %v470 = vunpack.c.l.b16 %v426
        %v471 = vunpack.c.l.b16 %v427
        %v472 = vunpack.c.l.b16 %v428
        %v473 = vunpack.c.l.b16 %v429
        %v474 = vunpack.c.l.b16 %v430
        %v475 = vunpack.c.l.b16 %v431
        %v476 = vunpack.c.l.b16 %v432
        %v477 = vunpack.c.l.b16 %v433
        %v478 = vunpack.c.l.b16 %v434
        %v479 = vunpack.c.l.b16 %v435
        %v480 = vunpack.c.l.b16 %v436
        %v481 = vunpack.c.l.b16 %v437
        %v482 = vunpack.c.l.b16 %v438
        %v483 = vunpack.c.l.b16 %v439
        %v484 = vunpack.c.l.b16 %v440
        %v485 = vunpack.c.l.b16 %v441
        %v486 = vpack.c.b16 %v471, %v470
        %v487 = vpack.c.b16 %v473, %v472
        %v488 = vpack.c.b16 %v475, %v474
        %v489 = vpack.c.b16 %v477, %v476
        %v490 = vpack.c.b16 %v479, %v478
        %v491 = vpack.c.b16 %v481, %v480
        %v492 = vpack.c.b16 %v483, %v482
        %v493 = vpack.c.b16 %v485, %v484
        %502 = vmatpush.bf16.msra.mxu0 %v449
        %503 = vmatpush.bf16.msra.mxu0 %v448
        %504 = vmatpush.bf16.msra.mxu0 %v447
        %505 = vmatpush.bf16.msra.mxu0 %v446
        %506 = vmatpush.bf16.msra.mxu0 %v445
        %507 = vmatpush.bf16.msra.mxu0 %v444
        %508 = vmatpush.bf16.msra.mxu0 %v443
        %509 = vmatpush.bf16.msra.mxu0 %v442
        %510 = vmatmul.bf16.gmra.mxu0 %v486
        %v511 = vpop.f32.mrf.mxu0
        %v512 = vadd.f32 %v452, %v511
        %v513 = vpop.f32.mrf.mxu0
        %v514 = vadd.f32 %v452, %v513
        %515 = vmatmul.bf16.gmra.mxu0 %v487
        %v516 = vpop.f32.mrf.mxu0
        %v517 = vadd.f32 %v452, %v516
        %v518 = vpop.f32.mrf.mxu0
        %v519 = vadd.f32 %v452, %v518
        %520 = vmatmul.bf16.gmra.mxu0 %v488
        %v521 = vpop.f32.mrf.mxu0
        %v522 = vadd.f32 %v452, %v521
        %v523 = vpop.f32.mrf.mxu0
        %v524 = vadd.f32 %v452, %v523
        %525 = vmatmul.bf16.gmra.mxu0 %v489
        %v526 = vpop.f32.mrf.mxu0
        %v527 = vadd.f32 %v452, %v526
        %v528 = vpop.f32.mrf.mxu0
        %v529 = vadd.f32 %v452, %v528
        %530 = vmatmul.bf16.gmra.mxu0 %v490
        %v531 = vpop.f32.mrf.mxu0
        %v532 = vadd.f32 %v452, %v531
        %v533 = vpop.f32.mrf.mxu0
        %v534 = vadd.f32 %v452, %v533
        %535 = vmatmul.bf16.gmra.mxu0 %v491
        %v536 = vpop.f32.mrf.mxu0
        %v537 = vadd.f32 %v452, %v536
        %v538 = vpop.f32.mrf.mxu0
        %v539 = vadd.f32 %v452, %v538
        %540 = vmatmul.bf16.gmra.mxu0 %v492
        %v541 = vpop.f32.mrf.mxu0
        %v542 = vadd.f32 %v452, %v541
        %v543 = vpop.f32.mrf.mxu0
        %v544 = vadd.f32 %v452, %v543
        %545 = vmatmul.bf16.gmra.mxu0 %v493
        %v546 = vpop.f32.mrf.mxu0
        %v547 = vadd.f32 %v452, %v546
        %v548 = vpop.f32.mrf.mxu0
        %v549 = vadd.f32 %v452, %v548
        %550 = vdwg.mxu0
        %p551 = scmp.eq.s32.totalorder %s19, 2
        %p552 = scmp.ne.s32.totalorder %s19, 2
        // Predicated region
        $region54: #{gcn_forward_padded.1} parent=31 // pred_check
          %p553 = pneg %p552
        $region55: #{gcn_forward_padded.1} parent=31 // pred_check_branch
          %555 = sbr.rel (%p553) target = $region57
        $region56: #{gcn_forward_padded.1} parent=31 // pred_region
          %v556 = vmax.f32 %v512, 0.0
          %v557 = vmax.f32 %v514, 0.0
          %v558 = vmax.f32 %v517, 0.0
          %v559 = vmax.f32 %v519, 0.0
          %v560 = vmax.f32 %v522, 0.0
          %v561 = vmax.f32 %v524, 0.0
          %v562 = vmax.f32 %v527, 0.0
          %v563 = vmax.f32 %v529, 0.0
          %v564 = vmax.f32 %v532, 0.0
          %v565 = vmax.f32 %v534, 0.0
          %v566 = vmax.f32 %v537, 0.0
          %v567 = vmax.f32 %v539, 0.0
          %v568 = vmax.f32 %v542, 0.0
          %v569 = vmax.f32 %v544, 0.0
          %v570 = vmax.f32 %v547, 0.0
          %v571 = vmax.f32 %v549, 0.0
          %v572 = vpack.c.bf16 %v556, %v556
          %v573 = vpack.c.bf16 %v557, %v557
          %v574 = vpack.c.bf16 %v558, %v558
          %v575 = vpack.c.bf16 %v559, %v559
          %v576 = vpack.c.bf16 %v560, %v560
          %v577 = vpack.c.bf16 %v561, %v561
          %v578 = vpack.c.bf16 %v562, %v562
          %v579 = vpack.c.bf16 %v563, %v563
          %v580 = vpack.c.bf16 %v564, %v564
          %v581 = vpack.c.bf16 %v565, %v565
          %v582 = vpack.c.bf16 %v566, %v566
          %v583 = vpack.c.bf16 %v567, %v567
          %v584 = vpack.c.bf16 %v568, %v568
          %v585 = vpack.c.bf16 %v569, %v569
          %v586 = vpack.c.bf16 %v570, %v570
          %v587 = vpack.c.bf16 %v571, %v571
          %588 = vst [vmem:[#allocation2] sm:$0xf] %v572
          %589 = vst [vmem:[#allocation2 + $0x4] sm:$0xf] %v573
          %590 = vst [vmem:[#allocation2 + $0x8] sm:$0xf] %v574
          %591 = vst [vmem:[#allocation2 + $0xc] sm:$0xf] %v575
          %592 = vst [vmem:[#allocation2 + $0x10] sm:$0xf] %v576
          %593 = vst [vmem:[#allocation2 + $0x14] sm:$0xf] %v577
          %594 = vst [vmem:[#allocation2 + $0x18] sm:$0xf] %v578
          %595 = vst [vmem:[#allocation2 + $0x1c] sm:$0xf] %v579
          %596 = vst [vmem:[#allocation2 + $0x20] sm:$0xf] %v580
          %597 = vst [vmem:[#allocation2 + $0x24] sm:$0xf] %v581
          %598 = vst [vmem:[#allocation2 + $0x28] sm:$0xf] %v582
          %599 = vst [vmem:[#allocation2 + $0x2c] sm:$0xf] %v583
          %600 = vst [vmem:[#allocation2 + $0x30] sm:$0xf] %v584
          %601 = vst [vmem:[#allocation2 + $0x34] sm:$0xf] %v585
          %602 = vst [vmem:[#allocation2 + $0x38] sm:$0xf] %v586
          %603 = vst [vmem:[#allocation2 + $0x3c] sm:$0xf] %v587
        $region57: #{gcn_forward_padded.1} parent=31 // pred_fallthru
          _
        // Predicated region
        $region58: #{gcn_forward_padded.1} parent=31 // pred_check
          %p604 = pneg %p551
        $region59: #{gcn_forward_padded.1} parent=31 // pred_check_branch
          %606 = sbr.rel (%p604) target = $region61
        $region60: #{gcn_forward_padded.1} parent=31 // pred_region
          %v607 = vlaneseq
          %v608 = vand.u32 %v607, 127
          %vm609 = vcmp.lt.s32.totalorder %v608, 8
          %v610 = vsel %vm609, %v512, -1e+30
          %v611 = vsel %vm609, %v514, -1e+30
          %v612 = vsel %vm609, %v517, -1e+30
          %v613 = vsel %vm609, %v519, -1e+30
          %v614 = vsel %vm609, %v522, -1e+30
          %v615 = vsel %vm609, %v524, -1e+30
          %v616 = vsel %vm609, %v527, -1e+30
          %v617 = vsel %vm609, %v529, -1e+30
          %v618 = vsel %vm609, %v532, -1e+30
          %v619 = vsel %vm609, %v534, -1e+30
          %v620 = vsel %vm609, %v537, -1e+30
          %v621 = vsel %vm609, %v539, -1e+30
          %v622 = vsel %vm609, %v542, -1e+30
          %v623 = vsel %vm609, %v544, -1e+30
          %v624 = vsel %vm609, %v547, -1e+30
          %v625 = vsel %vm609, %v549, -1e+30
          %626 = vmax.xlane.f32.xlu0 %v610
          %v627 = vpop.xlane.xlu0 %626
          %628 = vmax.xlane.f32.xlu0 %v611
          %v629 = vpop.xlane.xlu0 %628
          %630 = vmax.xlane.f32.xlu0 %v612
          %v631 = vpop.xlane.xlu0 %630
          %632 = vmax.xlane.f32.xlu0 %v613
          %v633 = vpop.xlane.xlu0 %632
          %634 = vmax.xlane.f32.xlu0 %v614
          %v635 = vpop.xlane.xlu0 %634
          %636 = vmax.xlane.f32.xlu0 %v615
          %v637 = vpop.xlane.xlu0 %636
          %638 = vmax.xlane.f32.xlu0 %v616
          %v639 = vpop.xlane.xlu0 %638
          %640 = vmax.xlane.f32.xlu0 %v617
          %v641 = vpop.xlane.xlu0 %640
          %642 = vmax.xlane.f32.xlu0 %v618
          %v643 = vpop.xlane.xlu0 %642
          %644 = vmax.xlane.f32.xlu0 %v619
          %v645 = vpop.xlane.xlu0 %644
          %646 = vmax.xlane.f32.xlu0 %v620
          %v647 = vpop.xlane.xlu0 %646
          %648 = vmax.xlane.f32.xlu0 %v621
          %v649 = vpop.xlane.xlu0 %648
          %650 = vmax.xlane.f32.xlu0 %v622
          %v651 = vpop.xlane.xlu0 %650
          %652 = vmax.xlane.f32.xlu0 %v623
          %v653 = vpop.xlane.xlu0 %652
          %654 = vmax.xlane.f32.xlu0 %v624
          %v655 = vpop.xlane.xlu0 %654
          %656 = vmax.xlane.f32.xlu0 %v625
          %v657 = vpop.xlane.xlu0 %656
          %v658 = vsub.f32 %v610, %v627
          %v659 = vsub.f32 %v611, %v629
          %v660 = vsub.f32 %v612, %v631
          %v661 = vsub.f32 %v613, %v633
          %v662 = vsub.f32 %v614, %v635
          %v663 = vsub.f32 %v615, %v637
          %v664 = vsub.f32 %v616, %v639
          %v665 = vsub.f32 %v617, %v641
          %v666 = vsub.f32 %v618, %v643
          %v667 = vsub.f32 %v619, %v645
          %v668 = vsub.f32 %v620, %v647
          %v669 = vsub.f32 %v621, %v649
          %v670 = vsub.f32 %v622, %v651
          %v671 = vsub.f32 %v623, %v653
          %v672 = vsub.f32 %v624, %v655
          %v673 = vsub.f32 %v625, %v657
          %v674 = vmul.f32 %v658, 1.442695
          %v675 = vpow.pop %v674
          %v676 = vmul.f32 %v659, 1.442695
          %v677 = vpow.pop %v676
          %v678 = vmul.f32 %v660, 1.442695
          %v679 = vpow.pop %v678
          %v680 = vmul.f32 %v661, 1.442695
          %v681 = vpow.pop %v680
          %v682 = vmul.f32 %v662, 1.442695
          %v683 = vpow.pop %v682
          %v684 = vmul.f32 %v663, 1.442695
          %v685 = vpow.pop %v684
          %v686 = vmul.f32 %v664, 1.442695
          %v687 = vpow.pop %v686
          %v688 = vmul.f32 %v665, 1.442695
          %v689 = vpow.pop %v688
          %v690 = vmul.f32 %v666, 1.442695
          %v691 = vpow.pop %v690
          %v692 = vmul.f32 %v667, 1.442695
          %v693 = vpow.pop %v692
          %v694 = vmul.f32 %v668, 1.442695
          %v695 = vpow.pop %v694
          %v696 = vmul.f32 %v669, 1.442695
          %v697 = vpow.pop %v696
          %v698 = vmul.f32 %v670, 1.442695
          %v699 = vpow.pop %v698
          %v700 = vmul.f32 %v671, 1.442695
          %v701 = vpow.pop %v700
          %v702 = vmul.f32 %v672, 1.442695
          %v703 = vpow.pop %v702
          %v704 = vmul.f32 %v673, 1.442695
          %v705 = vpow.pop %v704
          %v706 = vsel %vm609, %v675, 0.0
          %v707 = vsel %vm609, %v677, 0.0
          %v708 = vsel %vm609, %v679, 0.0
          %v709 = vsel %vm609, %v681, 0.0
          %v710 = vsel %vm609, %v683, 0.0
          %v711 = vsel %vm609, %v685, 0.0
          %v712 = vsel %vm609, %v687, 0.0
          %v713 = vsel %vm609, %v689, 0.0
          %v714 = vsel %vm609, %v691, 0.0
          %v715 = vsel %vm609, %v693, 0.0
          %v716 = vsel %vm609, %v695, 0.0
          %v717 = vsel %vm609, %v697, 0.0
          %v718 = vsel %vm609, %v699, 0.0
          %v719 = vsel %vm609, %v701, 0.0
          %v720 = vsel %vm609, %v703, 0.0
          %v721 = vsel %vm609, %v705, 0.0
          %722 = vadd.xlane.f32.xlu0 %v706
          %v723 = vpop.xlane.xlu0 %722
          %724 = vadd.xlane.f32.xlu0 %v707
          %v725 = vpop.xlane.xlu0 %724
          %726 = vadd.xlane.f32.xlu0 %v708
          %v727 = vpop.xlane.xlu0 %726
          %728 = vadd.xlane.f32.xlu0 %v709
          %v729 = vpop.xlane.xlu0 %728
          %730 = vadd.xlane.f32.xlu0 %v710
          %v731 = vpop.xlane.xlu0 %730
          %732 = vadd.xlane.f32.xlu0 %v711
          %v733 = vpop.xlane.xlu0 %732
          %734 = vadd.xlane.f32.xlu0 %v712
          %v735 = vpop.xlane.xlu0 %734
          %736 = vadd.xlane.f32.xlu0 %v713
          %v737 = vpop.xlane.xlu0 %736
          %738 = vadd.xlane.f32.xlu0 %v714
          %v739 = vpop.xlane.xlu0 %738
          %740 = vadd.xlane.f32.xlu0 %v715
          %v741 = vpop.xlane.xlu0 %740
          %742 = vadd.xlane.f32.xlu0 %v716
          %v743 = vpop.xlane.xlu0 %742
          %744 = vadd.xlane.f32.xlu0 %v717
          %v745 = vpop.xlane.xlu0 %744
          %746 = vadd.xlane.f32.xlu0 %v718
          %v747 = vpop.xlane.xlu0 %746
          %748 = vadd.xlane.f32.xlu0 %v719
          %v749 = vpop.xlane.xlu0 %748
          %750 = vadd.xlane.f32.xlu0 %v720
          %v751 = vpop.xlane.xlu0 %750
          %752 = vadd.xlane.f32.xlu0 %v721
          %v753 = vpop.xlane.xlu0 %752
          %v754 = vlog2.pop %v723
          %v755 = vmul.f32 %v754, 0.6931472
          %v756 = vlog2.pop %v725
          %v757 = vmul.f32 %v756, 0.6931472
          %v758 = vlog2.pop %v727
          %v759 = vmul.f32 %v758, 0.6931472
          %v760 = vlog2.pop %v729
          %v761 = vmul.f32 %v760, 0.6931472
          %v762 = vlog2.pop %v731
          %v763 = vmul.f32 %v762, 0.6931472
          %v764 = vlog2.pop %v733
          %v765 = vmul.f32 %v764, 0.6931472
          %v766 = vlog2.pop %v735
          %v767 = vmul.f32 %v766, 0.6931472
          %v768 = vlog2.pop %v737
          %v769 = vmul.f32 %v768, 0.6931472
          %v770 = vlog2.pop %v739
          %v771 = vmul.f32 %v770, 0.6931472
          %v772 = vlog2.pop %v741
          %v773 = vmul.f32 %v772, 0.6931472
          %v774 = vlog2.pop %v743
          %v775 = vmul.f32 %v774, 0.6931472
          %v776 = vlog2.pop %v745
          %v777 = vmul.f32 %v776, 0.6931472
          %v778 = vlog2.pop %v747
          %v779 = vmul.f32 %v778, 0.6931472
          %v780 = vlog2.pop %v749
          %v781 = vmul.f32 %v780, 0.6931472
          %v782 = vlog2.pop %v751
          %v783 = vmul.f32 %v782, 0.6931472
          %v784 = vlog2.pop %v753
          %v785 = vmul.f32 %v784, 0.6931472
          %v786 = vsub.f32 %v658, %v755
          %v787 = vsub.f32 %v659, %v757
          %v788 = vsub.f32 %v660, %v759
          %v789 = vsub.f32 %v661, %v761
          %v790 = vsub.f32 %v662, %v763
          %v791 = vsub.f32 %v663, %v765
          %v792 = vsub.f32 %v664, %v767
          %v793 = vsub.f32 %v665, %v769
          %v794 = vsub.f32 %v666, %v771
          %v795 = vsub.f32 %v667, %v773
          %v796 = vsub.f32 %v668, %v775
          %v797 = vsub.f32 %v669, %v777
          %v798 = vsub.f32 %v670, %v779
          %v799 = vsub.f32 %v671, %v781
          %v800 = vsub.f32 %v672, %v783
          %v801 = vsub.f32 %v673, %v785
          %v802 = vsel %vm609, %v786, 0.0
          %v803 = vsel %vm609, %v787, 0.0
          %v804 = vsel %vm609, %v788, 0.0
          %v805 = vsel %vm609, %v789, 0.0
          %v806 = vsel %vm609, %v790, 0.0
          %v807 = vsel %vm609, %v791, 0.0
          %v808 = vsel %vm609, %v792, 0.0
          %v809 = vsel %vm609, %v793, 0.0
          %v810 = vsel %vm609, %v794, 0.0
          %v811 = vsel %vm609, %v795, 0.0
          %v812 = vsel %vm609, %v796, 0.0
          %v813 = vsel %vm609, %v797, 0.0
          %v814 = vsel %vm609, %v798, 0.0
          %v815 = vsel %vm609, %v799, 0.0
          %v816 = vsel %vm609, %v800, 0.0
          %v817 = vsel %vm609, %v801, 0.0
          %v818 = vpack.c.bf16 %v802, %v802
          %v819 = vpack.c.bf16 %v803, %v803
          %v820 = vpack.c.bf16 %v804, %v804
          %v821 = vpack.c.bf16 %v805, %v805
          %v822 = vpack.c.bf16 %v806, %v806
          %v823 = vpack.c.bf16 %v807, %v807
          %v824 = vpack.c.bf16 %v808, %v808
          %v825 = vpack.c.bf16 %v809, %v809
          %v826 = vpack.c.bf16 %v810, %v810
          %v827 = vpack.c.bf16 %v811, %v811
          %v828 = vpack.c.bf16 %v812, %v812
          %v829 = vpack.c.bf16 %v813, %v813
          %v830 = vpack.c.bf16 %v814, %v814
          %v831 = vpack.c.bf16 %v815, %v815
          %v832 = vpack.c.bf16 %v816, %v816
          %v833 = vpack.c.bf16 %v817, %v817
          %834 = vst [vmem:[%s4] sm:$0xf] %v818
          %835 = vst [vmem:[%s4 + $0x4] sm:$0xf] %v819
          %836 = vst [vmem:[%s4 + $0x8] sm:$0xf] %v820
          %837 = vst [vmem:[%s4 + $0xc] sm:$0xf] %v821
          %838 = vst [vmem:[%s4 + $0x10] sm:$0xf] %v822
          %839 = vst [vmem:[%s4 + $0x14] sm:$0xf] %v823
          %840 = vst [vmem:[%s4 + $0x18] sm:$0xf] %v824
          %841 = vst [vmem:[%s4 + $0x1c] sm:$0xf] %v825
          %842 = vst [vmem:[%s4 + $0x20] sm:$0xf] %v826
          %843 = vst [vmem:[%s4 + $0x24] sm:$0xf] %v827
          %844 = vst [vmem:[%s4 + $0x28] sm:$0xf] %v828
          %845 = vst [vmem:[%s4 + $0x2c] sm:$0xf] %v829
          %846 = vst [vmem:[%s4 + $0x30] sm:$0xf] %v830
          %847 = vst [vmem:[%s4 + $0x34] sm:$0xf] %v831
          %848 = vst [vmem:[%s4 + $0x38] sm:$0xf] %v832
          %849 = vst [vmem:[%s4 + $0x3c] sm:$0xf] %v833
        $region61: #{gcn_forward_padded.1} parent=31 // pred_fallthru
          _
        // Predicated region
        $region62: #{gcn_forward_padded.1} parent=31 // pred_check
          %p850 = pneg %p105
        $region63: #{gcn_forward_padded.1} parent=31 // pred_check_branch
          %852 = sbr.rel (%p850) target = $region65
        $region64: #{gcn_forward_padded.1} parent=31 // pred_region
          _
        $region65: #{gcn_forward_padded.1} parent=31 // pred_fallthru
          _
        // Predicated region
        $region66: #{gcn_forward_padded.1} parent=31 // pred_check
          %p853 = pneg %p105
        $region67: #{gcn_forward_padded.1} parent=31 // pred_check_branch
          %855 = sbr.rel (%p853) target = $region69
        $region68: #{gcn_forward_padded.1} parent=31 // pred_region
          _
        $region69: #{gcn_forward_padded.1} parent=31 // pred_fallthru
          _
      $region32: #{gcn_forward_padded.1} parent=5 // pred_fallthru
        _
      %p856 = scmp.le.s32.totalorder 2, %s14
      // Predicated region
      $region70: #{gcn_forward_padded.1} parent=5 // pred_check
        %p857 = pneg %p856
      $region71: #{gcn_forward_padded.1} parent=5 // pred_check_branch
        %859 = sbr.rel (%p857) target = $region73
      $region72: #{gcn_forward_padded.1} parent=5 // pred_region
        %s860 = ssub.s32 %s14, 2
      $region73: #{gcn_forward_padded.1} parent=5 // pred_fallthru
        _
    $region6: #{gcn_forward_padded.1} parent=1 // loop_footer
      %s18 = sadd.s32 1, %s14
    $region7: #{gcn_forward_padded.1} parent=1 // loop_footer_branch
      %13 = sbr.rel target = $region3
    $region8: #{gcn_forward_padded.1} parent=1 // loop_exit
      _
    %861 = vsyncpa [#allocation4], 1
    %s862 = scalar_lea.sflag [#allocation4], 1
    %863 = vsyncpa %s862, 1
    %864 = vsyncpa [#allocation6], 1
    %s865 = scalar_lea.sflag [#allocation6], 1
    %866 = vsyncpa %s865, 1

</llo_original>
